<compile_context>
chip_gen: v6e
topology: v6e:2x2x1
jax: 0.10.0
libtpu: 0.0.40
codegen_flags: <defaults>
</compile_context>

<pallas_src>
import jax
import jax.numpy as jnp
from jax import lax
from jax.experimental import pallas as pl
from jax.experimental.pallas import tpu as pltpu


# ------------------------- tiled matmul (+bias) kernel -----------------------

def _matmul_bias_kernel(x_ref, w_ref, b_ref, o_ref, acc_ref):
    k = pl.program_id(2)

    @pl.when(k == 0)
    def _init():
        acc_ref[...] = jnp.zeros_like(acc_ref)

    acc_ref[...] += jnp.dot(x_ref[...], w_ref[...],
                            preferred_element_type=jnp.float32)

    @pl.when(k == pl.num_programs(2) - 1)
    def _finalize():
        o_ref[...] = (acc_ref[...] + b_ref[...].astype(jnp.float32)).astype(o_ref.dtype)


def _choose_tile(dim, max_tile, align):
    """Largest multiple of `align` that divides `dim` and is <= max_tile; else full."""
    if dim <= max_tile:
        return dim
    t = (max_tile // align) * align
    while t >= align:
        if dim % t == 0:
            return t
        t -= align
    return dim


def matmul_bias(x, w, b, *, max_bm=256, max_bn=512, max_bk=512):
    """y = x @ w + b ; x:(M,K) w:(K,N) b:(N,) -> (M,N) f32."""
    M, K = x.shape
    K2, N = w.shape
    assert K == K2 and b.shape == (N,)
    bm = _choose_tile(M, max_bm, 8)
    bn = _choose_tile(N, max_bn, 128)
    bk = _choose_tile(K, max_bk, 128)
    cost = pl.CostEstimate(
        flops=2 * M * N * K,
        transcendentals=0,
        bytes_accessed=(M * K + K * N) * x.dtype.itemsize + M * N * 4)
    return pl.pallas_call(
        _matmul_bias_kernel,
        out_shape=jax.ShapeDtypeStruct((M, N), jnp.float32),
        grid=(M // bm, N // bn, K // bk),
        in_specs=[pl.BlockSpec((bm, bk), lambda i, j, k: (i, k)),
                  pl.BlockSpec((bk, bn), lambda i, j, k: (k, j)),
                  pl.BlockSpec((1, bn), lambda i, j, k: (0, j))],
        out_specs=pl.BlockSpec((bm, bn), lambda i, j, k: (i, j)),
        scratch_shapes=[pltpu.VMEM((bm, bn), jnp.float32)],
        compiler_params=pltpu.CompilerParams(
            dimension_semantics=("parallel", "parallel", "arbitrary"),
            vmem_limit_bytes=64 * 1024 * 1024),
        cost_estimate=cost,
    )(x, w, b.reshape(1, N).astype(jnp.float32))


# --------------------------- fused attention kernel --------------------------

def _rel_attn_kernel(q_ref, k_ref, v_ref, rsp_ref, dvu_ref, o_ref):
    hb, t, dh = (int(s) for s in q_ref.shape)

    qs = q_ref[...]                    # (Hb, T, Dh) = (q + u) * scale  (pre-folded)

    # content term: ac = ((q + u) * scale) @ k^T
    ac = jnp.einsum("hqd,hkd->hqk", qs, k_ref[...],
                    preferred_element_type=jnp.float32)

    # position term (pre-shift): bd = ((q + v) * scale) @ rsp^T
    qv = qs + dvu_ref[...]             # dvu = (v - u) * scale, (1,1,Dh)
    bd = jnp.einsum("hqd,hld->hql", qv, rsp_ref[...],
                    preferred_element_type=jnp.float32)

    # ---- exact torch shift(), entirely in registers/VMEM ---------------------
    # shift(bd)[i, j] = bd[i, T-1-(i-j)]   if j <= i
    #                 = 0                  if j == i+1
    #                 = bd[i+1, j-i-2]     if j >  i+1
    # With D[i, j] = bd[i, (j-i-1) mod T]  (row i circularly rolled right by i+1):
    #   shift(bd)[i, j] = where(j <= i, D[i, j], where(j == i+1, 0, D[i+1, j]))
    # The per-row roll by (i+1) is built from log2(T) STATIC lane rolls gated by
    # the bits of (i+1) (all static slices / concats / selects -> safe lowering;
    # pltpu.roll(d, s, 2) would be the XLU-native alternative for the static rolls).
    row = lax.broadcasted_iota(jnp.int32, (hb, t, t), 1)
    col = lax.broadcasted_iota(jnp.int32, (hb, t, t), 2)
    d = bd
    for b in range(t.bit_length()):
        s = (1 << b) % t
        if s == 0:
            continue
        rolled = jnp.concatenate([d[..., t - s:], d[..., :t - s]], axis=-1)
        take = (((row + 1) >> b) & 1) == 1
        d = jnp.where(take, rolled, d)
    if t > 1:
        d_next = jnp.concatenate([d[:, 1:, :], d[:, :1, :]], axis=1)  # D[i+1, :]
    else:
        d_next = d
    bd_shifted = jnp.where(col <= row, d,
                           jnp.where(col == row + 1, 0.0, d_next))

    # softmax (f32 statistics; reciprocal on the EUP slot)
    att = ac + bd_shifted
    att = att - jnp.max(att, axis=-1, keepdims=True)
    p = jnp.exp(att)
    p = p * pl.reciprocal(jnp.sum(p, axis=-1, keepdims=True), approx=True)

    o_ref[...] = jnp.einsum("hqk,hkd->hqd", p.astype(v_ref.dtype), v_ref[...],
                            preferred_element_type=jnp.float32).astype(o_ref.dtype)


def _choose_heads_per_block(n, t, dh, budget_bytes=8 * 1024 * 1024):
    """Largest divisor of n that fits a VMEM budget and leaves >=2 grid steps."""
    per_head = 6 * t * t * 4 + 10 * t * max(dh, 128) * 4
    cap = max(1, budget_bytes // per_head)
    hb = 1
    for d in range(1, n + 1):
        if n % d == 0 and d <= cap and n // d >= 2:
            hb = d
    return hb


def rel_attention_core(qs, kh, vh, rsp, dvu, *, heads_per_block=None):
    N, T, Dh = qs.shape
    hb = heads_per_block or _choose_heads_per_block(N, T, Dh)
    assert N % hb == 0
    itm = qs.dtype.itemsize
    cost = pl.CostEstimate(
        flops=6 * N * T * T * Dh,            # ac + bd + pv matmuls
        transcendentals=N * T * T,           # exp
        bytes_accessed=4 * N * T * Dh * itm + N * T * Dh * 4)
    return pl.pallas_call(
        _rel_attn_kernel,
        out_shape=jax.ShapeDtypeStruct((N, T, Dh), jnp.float32),
        grid=(N // hb,),
        in_specs=[pl.BlockSpec((hb, T, Dh), lambda n: (n, 0, 0)),
                  pl.BlockSpec((hb, T, Dh), lambda n: (n, 0, 0)),
                  pl.BlockSpec((hb, T, Dh), lambda n: (n, 0, 0)),
                  pl.BlockSpec((hb, T, Dh), lambda n: (n, 0, 0)),
                  pl.BlockSpec((1, 1, Dh), lambda n: (0, 0, 0))],
        out_specs=pl.BlockSpec((hb, T, Dh), lambda n: (n, 0, 0)),
        compiler_params=pltpu.CompilerParams(
            dimension_semantics=("parallel",),
            vmem_limit_bytes=64 * 1024 * 1024),
        cost_estimate=cost,
    )(qs, kh, vh, rsp, dvu)


# ------------------------------- JAX glue ------------------------------------

def shift(t):
    """Exact replica of the torch shift(): zero-pad col, memory-view, drop row."""
    N, A, B = t.shape
    pad = jnp.zeros((N, A, 1), t.dtype)
    t = jnp.concatenate([pad, t], axis=-1)
    t = t.reshape(N, B + 1, A)
    return t[:, 1:, :]


def reshape_mh(x, n_heads):
    B, T, D = x.shape
    x = x.reshape(B, T, n_heads, D // n_heads)
    x = jnp.transpose(x, (0, 2, 1, 3))
    return x.reshape(B * n_heads, T, D // n_heads)


def reshape_out(x, n_heads):
    N, T, Dh = x.shape
    B = N // n_heads
    x = x.reshape(B, n_heads, T, Dh)
    x = jnp.transpose(x, (0, 2, 1, 3))
    return x.reshape(B, T, n_heads * Dh)


def rel_attention_forward(params, x, u, v, pos, n_heads, *,
                          compute_dtype=jnp.float32, heads_per_block=None):
    """RelAttention.forward with mem=None, mask=None (eval mode)."""
    B, T, D = x.shape
    Dh = D // n_heads
    scale = 1.0 / (D ** 0.5)

    # Fold the content bias u and the attention scale into the q projection:
    #   q_eff = (x @ (Wq*scale) + (bq + tile(u,H))*scale)  ==  (q + u) * scale
    wq_eff = params["wq"] * scale
    bq_eff = (params["bq"] + jnp.tile(u, n_heads)) * scale
    w_qkv = jnp.concatenate([wq_eff, params["wk"], params["wv"]], axis=1)   # (D, 3D)
    b_qkv = jnp.concatenate([bq_eff, params["bk"], params["bv"]], axis=0)   # (3D,)

    # fused q/k/v projection: x is read from HBM once
    x2d = x.reshape(B * T, D).astype(compute_dtype)
    qkv = matmul_bias(x2d, w_qkv.astype(compute_dtype), b_qkv)              # (B*T, 3D) f32
    q, k, vv = qkv[:, :D], qkv[:, D:2 * D], qkv[:, 2 * D:]

    qs = reshape_mh(q.reshape(B, T, D), n_heads).astype(compute_dtype)      # (q+u)*scale
    kh = reshape_mh(k.reshape(B, T, D), n_heads).astype(compute_dtype)
    vh = reshape_mh(vv.reshape(B, T, D), n_heads).astype(compute_dtype)
    rsp = reshape_mh(pos, n_heads).astype(compute_dtype)
    dvu = ((v - u) * scale).reshape(1, 1, Dh).astype(compute_dtype)         # (v-u)*scale

    out = rel_attention_core(qs, kh, vh, rsp, dvu,
                             heads_per_block=heads_per_block)               # (B*H, T, Dh)
    out = reshape_out(out, n_heads)                                         # (B, T, D)

    y = matmul_bias(out.reshape(B * T, D).astype(compute_dtype),
                    params["wc"].astype(compute_dtype), params["bc"])
    return y.reshape(B, T, D)


def reference_forward(params, x, u, v, pos, n_heads):
    """Pure-JAX reference mirroring the torch module (eval mode)."""
    B, T, D = x.shape
    scale = 1.0 / (D ** 0.5)
    lin = lambda t, w, b: t @ w + b
    q = reshape_mh(lin(x, params["wq"], params["bq"]), n_heads)
    k = reshape_mh(lin(x, params["wk"], params["bk"]), n_heads)
    vv = reshape_mh(lin(x, params["wv"], params["bv"]), n_heads)
    rsp = reshape_mh(pos, n_heads)
    ac = jnp.einsum("ijk,imk->ijm", q + u, k)
    bd = jnp.einsum("ijk,ilk->ijl", q + v, rsp)
    bd = shift(bd)
    att = (ac + bd) * scale
    att = jax.nn.softmax(att, axis=-1)
    out = att @ vv
    out = reshape_out(out, n_heads)
    return lin(out, params["wc"], params["bc"])


# --------------------------------- main --------------------------------------

if __name__ == "__main__":
    B, T, D, H = 2, 8, 32, 4
    Dh = D // H

    key = jax.random.PRNGKey(0)
    keys = jax.random.split(key, 12)

    def init_linear(kw, kb, din, dout):
        lim = 1.0 / (din ** 0.5)
        w = jax.random.uniform(kw, (din, dout), jnp.float32, -lim, lim)
        b = jax.random.uniform(kb, (dout,), jnp.float32, -lim, lim)
        return w, b

    wq, bq = init_linear(keys[0], keys[1], D, D)
    wk, bk = init_linear(keys[2], keys[3], D, D)
    wv, bv = init_linear(keys[4], keys[5], D, D)
    wc, bc = init_linear(keys[6], keys[7], D, D)
    params = dict(wq=wq, bq=bq, wk=wk, bk=bk, wv=wv, bv=bv, wc=wc, bc=bc)

    x = jax.random.normal(keys[8], (B, T, D), jnp.float32)
    pos = jax.random.normal(keys[9], (B, T, D), jnp.float32)
    u = jax.random.normal(keys[10], (Dh,), jnp.float32)   # content bias
    v = jax.random.normal(keys[11], (Dh,), jnp.float32)   # position bias

    ref = reference_forward(params, x, u, v, pos, H)

    # f32 MXU path (tolerance slack covers the approx EUP reciprocal)
    out = rel_attention_forward(params, x, u, v, pos, H)
    jax.block_until_ready(out)
    assert out.shape == (B, T, D)
    assert jnp.allclose(out, ref, atol=2e-2, rtol=2e-2), "f32 mismatch vs reference"

    # bf16 MXU-operand path (f32 accumulators / softmax stats), looser tolerance
    out_bf16 = rel_attention_forward(params, x, u, v, pos, H,
                                     compute_dtype=jnp.bfloat16)
    jax.block_until_ready(out_bf16)
    assert jnp.allclose(out_bf16, ref, atol=1e-1, rtol=1e-1), "bf16 mismatch vs reference"

    print("KERNEL_OK")
</pallas_src>

<mosaic_0001>
module attributes {stable_mosaic.version = 11 : i64} {
  func.func @_matmul_bias_kernel(%arg0: i32, %arg1: i32, %arg2: i32, %arg3: memref<16x32xf32, #tpu.memory_space<vmem>>, %arg4: memref<32x96xf32, #tpu.memory_space<vmem>>, %arg5: memref<1x96xf32, #tpu.memory_space<vmem>>, %arg6: memref<16x96xf32, #tpu.memory_space<vmem>>, %arg7: memref<16x96xf32, #tpu.memory_space<vmem>>) attributes {dimension_semantics = [#tpu.dimension_semantics<parallel>, #tpu.dimension_semantics<parallel>, #tpu.dimension_semantics<arbitrary>], iteration_bounds = array<i64: 1, 1, 1>, scalar_prefetch = 0 : i64, scratch_operands = 1 : i64, tpu.core_type = #tpu.core_type<tc>, window_params = [{transform_indices = @transform_0, window_bounds = array<i64: 16, 32>}, {transform_indices = @transform_1, window_bounds = array<i64: 32, 96>}, {transform_indices = @transform_2, window_bounds = array<i64: 1, 96>}, {transform_indices = @transform_3, window_bounds = array<i64: 16, 96>}]} {
    %c0_i32 = arith.constant 0 : i32
    %0 = arith.cmpi eq, %arg2, %c0_i32 : i32
    %1 = arith.extui %0 : i1 to i32
    %c0_i32_0 = arith.constant 0 : i32
    %2 = arith.cmpi ne, %1, %c0_i32_0 : i32
    scf.if %2 {
      %cst_10 = arith.constant 0.000000e+00 : f32
      %12 = vector.broadcast %cst_10 : f32 to vector<16x96xf32>
      %c0_11 = arith.constant 0 : index
      %c0_12 = arith.constant 0 : index
      %13 = vector.load %arg7[%c0_11, %c0_12] : memref<16x96xf32, #tpu.memory_space<vmem>>, vector<16x96xf32>
      tpu.vector_store %arg7[%c0_11, %c0_12], %12 {strides = array<i32>} : memref<16x96xf32, #tpu.memory_space<vmem>>, vector<16x96xf32>,
    } else {
    }
    %c0 = arith.constant 0 : index
    %c0_1 = arith.constant 0 : index
    %3 = vector.load %arg7[%c0, %c0_1] : memref<16x96xf32, #tpu.memory_space<vmem>>, vector<16x96xf32>
    %c0_2 = arith.constant 0 : index
    %c0_3 = arith.constant 0 : index
    %4 = vector.load %arg3[%c0_2, %c0_3] : memref<16x32xf32, #tpu.memory_space<vmem>>, vector<16x32xf32>
    %c0_4 = arith.constant 0 : index
    %c0_5 = arith.constant 0 : index
    %5 = vector.load %arg4[%c0_4, %c0_5] : memref<32x96xf32, #tpu.memory_space<vmem>>, vector<32x96xf32>
    %cst = arith.constant dense<0.000000e+00> : vector<16x96xf32>
    %6 = tpu.matmul %4, %5, %cst {dimension_numbers = #tpu.dot_dimension_numbers<[1], [0], [0], [1], [0, 0, 1, 1], [], []>} : vector<16x32xf32>, vector<32x96xf32>, vector<16x96xf32> -> vector<16x96xf32>
    %7 = arith.addf %3, %6 : vector<16x96xf32>
    %c0_6 = arith.constant 0 : index
    %c0_7 = arith.constant 0 : index
    %8 = vector.load %arg7[%c0_6, %c0_7] : memref<16x96xf32, #tpu.memory_space<vmem>>, vector<16x96xf32>
    tpu.vector_store %arg7[%c0_6, %c0_7], %7 {strides = array<i32>} : memref<16x96xf32, #tpu.memory_space<vmem>>, vector<16x96xf32>,
    %c0_i32_8 = arith.constant 0 : i32
    %9 = arith.cmpi eq, %arg2, %c0_i32_8 : i32
    %10 = arith.extui %9 : i1 to i32
    %c0_i32_9 = arith.constant 0 : i32
    %11 = arith.cmpi ne, %10, %c0_i32_9 : i32
    scf.if %11 {
      %c0_10 = arith.constant 0 : index
      %c0_11 = arith.constant 0 : index
      %12 = vector.load %arg7[%c0_10, %c0_11] : memref<16x96xf32, #tpu.memory_space<vmem>>, vector<16x96xf32>
      %c0_12 = arith.constant 0 : index
      %c0_13 = arith.constant 0 : index
      %13 = vector.load %arg5[%c0_12, %c0_13] : memref<1x96xf32, #tpu.memory_space<vmem>>, vector<1x96xf32>
      %14 = vector.broadcast %13 : vector<1x96xf32> to vector<16x96xf32>
      %15 = arith.addf %12, %14 : vector<16x96xf32>
      %c0_14 = arith.constant 0 : index
      %c0_15 = arith.constant 0 : index
      %16 = vector.load %arg6[%c0_14, %c0_15] : memref<16x96xf32, #tpu.memory_space<vmem>>, vector<16x96xf32>
      tpu.vector_store %arg6[%c0_14, %c0_15], %15 {strides = array<i32>} : memref<16x96xf32, #tpu.memory_space<vmem>>, vector<16x96xf32>,
    } else {
    }
    return
  }
  func.func @transform_0(%arg0: i32, %arg1: i32, %arg2: i32) -> (i32, i32) {
    %c0_i32 = arith.constant 0 : i32
    return %arg0, %arg2 : i32, i32
  }
  func.func @transform_1(%arg0: i32, %arg1: i32, %arg2: i32) -> (i32, i32) {
    %c0_i32 = arith.constant 0 : i32
    return %arg2, %arg1 : i32, i32
  }
  func.func @transform_2(%arg0: i32, %arg1: i32, %arg2: i32) -> (i32, i32) {
    %c0_i32 = arith.constant 0 : i32
    %c0_i32_0 = arith.constant 0 : i32
    return %c0_i32, %arg1 : i32, i32
  }
  func.func @transform_3(%arg0: i32, %arg1: i32, %arg2: i32) -> (i32, i32) {
    %c0_i32 = arith.constant 0 : i32
    return %arg0, %arg1 : i32, i32
  }
}

</mosaic_0001>

<llo_original>
// kernel: tpu_custom_call.1
$region0: #{tpu_custom_call.1}
  #allocation0 [shape = 'u32[]', space=smem, size = 0x4, offset = 0x4, fixed_abs, tag = 'smem constant byte address 0x4 - core index']
  #allocation1 [shape = 'u32[144,128]{1,0:T(1,128)}', space=vmem, size = 0x12000, scoped, tag = 'internal scratch']
  #allocation2 [shape = 'f32[16,96]{1,0:T(8,128)}', space=vmem, size = 0x2000, scoped, tag = 'scratch operand']
  %s0 = inlined_call_operand.hbm [shape: f32[16,32], index: 0, kind: input, shape index: {}]
  %s1 = inlined_call_operand.hbm [shape: f32[32,96], index: 1, kind: input, shape index: {}]
  %s2 = inlined_call_operand.vmem [shape: f32[1,96], index: 2, kind: input, shape index: {}]
  %s3 = inlined_call_operand.hbm [shape: f32[16,96], index: 3, kind: output, shape index: {}]
  %s4 = sld [smem:[#allocation0]]
  $region38: #{tpu_custom_call.1} parent=0
    _
  %s6 = ssub.s32 1, %s4
  %s7 = scalar_select 0, %s6, %s4
  $region1: #{tpu_custom_call.1} parent=0
    #allocation3 [shape = 'u8[8192]{0}', space=vmem, size = 0x2000, scoped, tag = 'input window, operand 0, single buffered']
    #allocation4 [shape = 's32[1]{0}', space=sflag, size = 0x4, scoped, tag = 'scoped memory for tpu_custom_call.1']
    #allocation5 [shape = 's32[1]{0}', space=sflag, size = 0x4, scoped, tag = 'scoped memory for tpu_custom_call.1']
    #allocation6 [shape = 'u8[16384]{0}', space=vmem, size = 0x4000, scoped, tag = 'input window, operand 1, single buffered']
    #allocation7 [shape = 's32[1]{0}', space=sflag, size = 0x4, scoped, tag = 'scoped memory for tpu_custom_call.1']
    #allocation8 [shape = 'u8[8192]{0}', space=vmem, size = 0x2000, scoped, tag = 'output window, operand 0, single buffered']
    %8 = vsyncpa [#allocation4], 0
    %9 = vsyncpa [#allocation7], 0
    %10 = vsyncpa [#allocation5], 0
    // Predicated region
    $region2: #{tpu_custom_call.1} parent=1 // pred_check
      _
    $region3: #{tpu_custom_call.1} parent=1 // pred_check_branch
      %12 = sbr.rel (0) target = $region5
    $region4: #{tpu_custom_call.1} parent=1 // pred_region
      %s14 = ssub.s32 256, 256
      %15 = vsyncadd [#allocation4], %s14
      %s16 = sshll.u32 [#allocation3], 4
      %s17 = int_to_ptr.vmem [resolvable:$true] %s16
      %22 = dma.hbm_to_vmem [thread:$0]  %s0, 256, %s17, [#allocation4], 128, 128, 8
    $region5: #{tpu_custom_call.1} parent=1 // pred_fallthru
      _
    // Predicated region
    $region6: #{tpu_custom_call.1} parent=1 // pred_check
      _
    $region7: #{tpu_custom_call.1} parent=1 // pred_check_branch
      %24 = sbr.rel (0) target = $region9
    $region8: #{tpu_custom_call.1} parent=1 // pred_region
      %s26 = ssub.s32 512, 512
      %27 = vsyncadd [#allocation7], %s26
      %s28 = sshll.u32 [#allocation6], 4
      %s29 = int_to_ptr.vmem [resolvable:$true] %s28
      %34 = dma.hbm_to_vmem [thread:$0]  %s1, 512, %s29, [#allocation7], 128, 128, 8
    $region9: #{tpu_custom_call.1} parent=1 // pred_fallthru
      _
    // Predicated region
    $region10: #{tpu_custom_call.1} parent=1 // pred_check
      _
    $region11: #{tpu_custom_call.1} parent=1 // pred_check_branch
      %36 = sbr.rel (0) target = $region13
    $region12: #{tpu_custom_call.1} parent=1 // pred_region
      _
    $region13: #{tpu_custom_call.1} parent=1 // pred_fallthru
      _
    // Predicated region
    $region14: #{tpu_custom_call.1} parent=1 // pred_check
      _
    $region15: #{tpu_custom_call.1} parent=1 // pred_check_branch
      %38 = sbr.rel (0) target = $region17
    $region16: #{tpu_custom_call.1} parent=1 // pred_region
      %39 = dma.done [#allocation4], 256
    $region17: #{tpu_custom_call.1} parent=1 // pred_fallthru
      _
    // Predicated region
    $region18: #{tpu_custom_call.1} parent=1 // pred_check
      _
    $region19: #{tpu_custom_call.1} parent=1 // pred_check_branch
      %41 = sbr.rel (0) target = $region21
    $region20: #{tpu_custom_call.1} parent=1 // pred_region
      %42 = dma.done [#allocation7], 512
    $region21: #{tpu_custom_call.1} parent=1 // pred_fallthru
      _
    %p43 = scmp.eq.s32.totalorder 0, 0
    // Predicated region
    $region22: #{tpu_custom_call.1} parent=1 // pred_check
      %p44 = pneg %p43
    $region23: #{tpu_custom_call.1} parent=1 // pred_check_branch
      %46 = sbr.rel (%p44) target = $region25
    $region24: #{tpu_custom_call.1} parent=1 // pred_region
      %vm47 = vcmask 785408
      %48 = vst.msk [vmem:[#allocation2] sm:$0xff] %vm47, 0.0
      %49 = vst.msk [vmem:[#allocation2 + $0x8] sm:$0xff] %vm47, 0.0
    $region25: #{tpu_custom_call.1} parent=1 // pred_fallthru
      _
    %v50 = vld [vmem:[#allocation2] sm:$0xff]
    %v51 = vld [vmem:[#allocation2 + $0x8] sm:$0xff]
    %v52 = vld [vmem:[#allocation3] sm:$0xff]
    %v53 = vld [vmem:[#allocation3 + $0x8] sm:$0xff]
    %v54 = vld [vmem:[#allocation6] sm:$0xff]
    %v55 = vld [vmem:[#allocation6 + $0x8] sm:$0xff]
    %v56 = vld [vmem:[#allocation6 + $0x10] sm:$0xff]
    %v57 = vld [vmem:[#allocation6 + $0x18] sm:$0xff]
    %vm58 = vcmask 261120
    %v60 = vsel %vm58, %v52, 0
    %v63 = vsel %vm58, %v53, 0
    %65 = vmatprep.subr.mxu0 0.0
    %66 = vmatpush1.msra.mxu0 0.0
    %67 = vmatprep.subr.mxu0 0.0
    %68 = vmatpush1.msra.mxu0 0.0
    %69 = vmatprep.subr.mxu0 0.0
    %70 = vmatpush1.msra.mxu0 0.0
    %71 = vmatprep.subr.mxu0 0.0
    %72 = vmatpush1.msra.mxu0 0.0
    %73 = vmatprep.subr.mxu0 0.0
    %74 = vmatpush1.msra.mxu0 0.0
    %75 = vmatprep.subr.mxu0 0.0
    %76 = vmatpush1.msra.mxu0 0.0
    %77 = vmatprep.subr.mxu0 0.0
    %78 = vmatpush1.msra.mxu0 0.0
    %79 = vmatprep.subr.mxu0 0.0
    %80 = vmatpush1.msra.mxu0 0.0
    %81 = vmatprep.subr.mxu0 0.0
    %82 = vmatpush1.msra.mxu0 0.0
    %83 = vmatprep.subr.mxu0 0.0
    %84 = vmatpush1.msra.mxu0 0.0
    %85 = vmatprep.subr.mxu0 0.0
    %86 = vmatpush1.msra.mxu0 0.0
    %87 = vmatprep.subr.mxu0 0.0
    %88 = vmatpush1.msra.mxu0 0.0
    %89 = vmatprep.subr.mxu0 0.0
    %90 = vmatpush1.msra.mxu0 %v57
    %91 = vmatprep.subr.mxu0 0.0
    %92 = vmatpush1.msra.mxu0 %v56
    %93 = vmatprep.subr.mxu0 0.0
    %94 = vmatpush1.msra.mxu0 %v55
    %95 = vmatprep.subr.mxu0 0.0
    %96 = vmatpush1.msra.mxu0 %v54
    %97 = vmatprep.subr.mxu0 0.0
    %98 = vmatpush2.msra.mxu0 0.0
    %99 = vmatprep.subr.mxu0 0.0
    %100 = vmatpush2.msra.mxu0 0.0
    %101 = vmatprep.subr.mxu0 0.0
    %102 = vmatpush2.msra.mxu0 0.0
    %103 = vmatprep.subr.mxu0 0.0
    %104 = vmatpush2.msra.mxu0 0.0
    %105 = vmatprep.subr.mxu0 0.0
    %106 = vmatpush2.msra.mxu0 0.0
    %107 = vmatprep.subr.mxu0 0.0
    %108 = vmatpush2.msra.mxu0 0.0
    %109 = vmatprep.subr.mxu0 0.0
    %110 = vmatpush2.msra.mxu0 0.0
    %111 = vmatprep.subr.mxu0 0.0
    %112 = vmatpush2.msra.mxu0 0.0
    %113 = vmatprep.subr.mxu0 0.0
    %114 = vmatpush2.msra.mxu0 0.0
    %115 = vmatprep.subr.mxu0 0.0
    %116 = vmatpush2.msra.mxu0 0.0
    %117 = vmatprep.subr.mxu0 0.0
    %118 = vmatpush2.msra.mxu0 0.0
    %119 = vmatprep.subr.mxu0 0.0
    %120 = vmatpush2.msra.mxu0 0.0
    %121 = vmatprep.subr.mxu0 0.0
    %122 = vmatpush2.msra.mxu0 0.0
    %123 = vmatprep.subr.mxu0 0.0
    %124 = vmatpush2.msra.mxu0 0.0
    %125 = vmatprep.subr.mxu0 0.0
    %126 = vmatpush2.msra.mxu0 0.0
    %127 = vmatprep.subr.mxu0 0.0
    %128 = vmatpush2.msra.mxu0 0.0
    %129 = vmatprep.mubr.f32.mxu0 0.0
    %130 = vmatmul.mubr.f32.gmra.mxu0 %v60
    %v131 = vpop.f32.mrf.mxu0
    %v132 = vadd.f32 0.0, %v131
    %v133 = vpop.f32.mrf.mxu0
    %134 = vmatprep.mubr.f32.mxu0 0.0
    %135 = vmatmul.mubr.f32.gmra.mxu0 %v63
    %v136 = vpop.f32.mrf.mxu0
    %v137 = vadd.f32 0.0, %v136
    %v138 = vpop.f32.mrf.mxu0
    %139 = vdwg.mxu0
    %v140 = vadd.f32 %v50, %v132
    %v141 = vadd.f32 %v51, %v137
    %vm142 = vcmask 785408
    %143 = vst.msk [vmem:[#allocation2] sm:$0xff] %vm142, %v140
    %144 = vst.msk [vmem:[#allocation2 + $0x8] sm:$0xff] %vm142, %v141
    // Predicated region
    $region26: #{tpu_custom_call.1} parent=1 // pred_check
      %p145 = pneg %p43
    $region27: #{tpu_custom_call.1} parent=1 // pred_check_branch
      %147 = sbr.rel (%p145) target = $region29
    $region28: #{tpu_custom_call.1} parent=1 // pred_region
      %v148 = vld [vmem:[#allocation2] sm:$0xff]
      %v149 = vld [vmem:[#allocation2 + $0x8] sm:$0xff]
      %v150 = vld [vmem:[%s2] sm:$0x1]
      %v152 = vlaneseq
      %v153 = vshrl.u32 %v152, 7
      %v154 = vsub.s32 0, %v153
      %v155 = vrot.slane %v150, %v154
      %v157 = vadd.f32 %v148, %v155
      %v158 = vadd.f32 %v149, %v155
      %159 = vst.msk [vmem:[#allocation8] sm:$0xff] %vm142, %v157
      %160 = vst.msk [vmem:[#allocation8 + $0x8] sm:$0xff] %vm142, %v158
    $region29: #{tpu_custom_call.1} parent=1 // pred_fallthru
      _
    // Predicated region
    $region30: #{tpu_custom_call.1} parent=1 // pred_check
      _
    $region31: #{tpu_custom_call.1} parent=1 // pred_check_branch
      %162 = sbr.rel (0) target = $region33
    $region32: #{tpu_custom_call.1} parent=1 // pred_region
      %s164 = ssub.s32 256, 256
      %165 = vsyncadd [#allocation5], %s164
      %s166 = sshll.u32 [#allocation8], 4
      %s167 = int_to_ptr.vmem [resolvable:$true] %s166
      %172 = dma.vmem_to_hbm [thread:$0]  %s167, 256, %s3, [#allocation5], 128, 128, 8
    $region33: #{tpu_custom_call.1} parent=1 // pred_fallthru
      _
    // Predicated region
    $region34: #{tpu_custom_call.1} parent=1 // pred_check
      _
    $region35: #{tpu_custom_call.1} parent=1 // pred_check_branch
      %174 = sbr.rel (0) target = $region37
    $region36: #{tpu_custom_call.1} parent=1 // pred_region
      %175 = dma.done [#allocation5], 256
    $region37: #{tpu_custom_call.1} parent=1 // pred_fallthru
      _
    %176 = vsyncpa [#allocation4], 1
    %177 = vsyncpa [#allocation7], 1
    %178 = vsyncpa [#allocation5], 1

</llo_original>
